<compile_context>
chip_gen: v5e
topology: v5e:2x2
jax: 0.10.0
libtpu: 0.0.40
codegen_flags: <defaults>
</compile_context>

<pallas_src>
import functools

import numpy as np
import jax
import jax.numpy as jnp
from jax import lax
from jax.experimental import pallas as pl
from jax.experimental.pallas import tpu as pltpu

# ---------------- demo config (small, consistent with SASRec usage) ----------
B = 2      # batch
N = 8      # sequence length
D = 32     # hidden_nums

MAX_ROW_TILE = 512   # rows per grid step at production sizes (multiple of 8,
                     # sized against v7x's 64 MiB VMEM with double-buffering headroom)


# ----------------------------- Pallas kernel --------------------------------
def pwff_kernel(x_ref, w1_ref, b1_ref, w2_ref, b2_ref, o_ref):
    """Point-wise FFN with residual on one row tile.

    x_ref:  (tile_rows, D) f32
    w*_ref: (D, D) in PyTorch (out, in) layout (dtype = matmul dtype)
    b*_ref: (1, D) f32
    o_ref:  (tile_rows, D) f32
    """
    x = x_ref[...]                                   # f32, kept for the residual
    xm = x.astype(w1_ref.dtype)                      # cast only at the MXU boundary

    # Contract over the "in" axis of the PyTorch-layout (out, in) weights:
    # result[r, o] = sum_i x[r, i] * W[o, i]  ==  x @ W^T
    dn = (((1,), (1,)), ((), ()))

    h = lax.dot_general(xm, w1_ref[...], dn, preferred_element_type=jnp.float32)
    h = jnp.maximum(h + b1_ref[...], 0.0)            # bias + ReLU in f32 (VPU)

    y = lax.dot_general(h.astype(w2_ref.dtype), w2_ref[...], dn,
                        preferred_element_type=jnp.float32)
    o_ref[...] = y + b2_ref[...] + x                 # bias + residual in f32


# ------------------------------- wrapper -------------------------------------
@functools.partial(jax.jit, static_argnames=("matmul_dtype",))
def pointwise_ffn_forward(params, x, matmul_dtype=jnp.float32):
    """x: (B, N, D) float32 -> (B, N, D) float32."""
    bsz, seq, dim = x.shape
    rows = bsz * seq
    x2d = x.reshape(rows, dim)

    # Row tile: multiple of 8, capped at MAX_ROW_TILE. Pallas masks the ragged
    # last block automatically; each output row depends only on its own input row,
    # so padded rows are harmless.
    tile_rows = min(MAX_ROW_TILE, ((rows + 7) // 8) * 8)
    grid = (pl.cdiv(rows, tile_rows),)

    # Weights stay in PyTorch (out, in) layout — no per-call transpose.
    w1 = params["w1"].astype(matmul_dtype)
    w2 = params["w2"].astype(matmul_dtype)
    b1 = params["b1"].reshape(1, dim).astype(jnp.float32)
    b2 = params["b2"].reshape(1, dim).astype(jnp.float32)

    row_spec = pl.BlockSpec((tile_rows, dim), lambda i: (i, 0))
    resident_mat = pl.BlockSpec((dim, dim), lambda i: (0, 0))   # same block every step
    resident_vec = pl.BlockSpec((1, dim), lambda i: (0, 0))

    out2d = pl.pallas_call(
        pwff_kernel,
        grid=grid,
        in_specs=[row_spec, resident_mat, resident_vec, resident_mat, resident_vec],
        out_specs=row_spec,
        out_shape=jax.ShapeDtypeStruct((rows, dim), jnp.float32),
        compiler_params=pltpu.CompilerParams(
            dimension_semantics=("parallel",),      # shard row grid across v7x TCs
        ),
    )(x2d, w1, b1, w2, b2)
    return out2d.reshape(bsz, seq, dim)


# ---------------------- deterministic parameter init -------------------------
def init_params(key):
    k1, k2, k3, k4 = jax.random.split(key, 4)

    def nrm(k, shape, s=0.05):
        return jax.random.normal(k, shape, jnp.float32) * s

    # Conv1d(k=1) weights stored PyTorch-style (out_channels, in_channels).
    return dict(
        w1=nrm(k1, (D, D)), b1=nrm(k2, (D,)),
        w2=nrm(k3, (D, D)), b2=nrm(k4, (D,)),
    )


# ---------------------- pure-JAX reference (PyTorch semantics) ---------------
def ref_forward(params, x):
    # use_conv=True path: transpose -> Conv1d(k=1) -> ReLU -> Conv1d(k=1) -> transpose
    xt = jnp.swapaxes(x, -1, -2)                                       # (B, D, N)
    h = jnp.einsum("oi,bin->bon", params["w1"], xt) + params["b1"][None, :, None]
    h = jnp.maximum(h, 0.0)
    y = jnp.einsum("oi,bin->bon", params["w2"], h) + params["b2"][None, :, None]
    y = jnp.swapaxes(y, -1, -2)                                        # (B, N, D)
    return y + x                                                       # residual


if __name__ == "__main__":
    key = jax.random.PRNGKey(0)
    pkey, xkey = jax.random.split(key)
    params = init_params(pkey)
    x = jax.random.normal(xkey, (B, N, D), jnp.float32)

    # f32 MXU path for the small demo (bf16 path: matmul_dtype=jnp.bfloat16 at
    # production shapes on v6e/v7x; loosen tolerances accordingly).
    out = pointwise_ffn_forward(params, x)
    jax.block_until_ready(out)

    ref = ref_forward(params, x)
    assert out.shape == (B, N, D)
    np.testing.assert_allclose(np.asarray(out), np.asarray(ref), rtol=1e-5, atol=1e-5)
    print("KERNEL_OK")
</pallas_src>

<mosaic_0001>
module attributes {stable_mosaic.version = 11 : i64} {
  func.func @pwff_kernel(%arg0: i32, %arg1: memref<16x32xf32, #tpu.memory_space<vmem>>, %arg2: memref<32x32xf32, #tpu.memory_space<vmem>>, %arg3: memref<1x32xf32, #tpu.memory_space<vmem>>, %arg4: memref<32x32xf32, #tpu.memory_space<vmem>>, %arg5: memref<1x32xf32, #tpu.memory_space<vmem>>, %arg6: memref<16x32xf32, #tpu.memory_space<vmem>>) attributes {dimension_semantics = [#tpu.dimension_semantics<parallel>], iteration_bounds = array<i64: 1>, scalar_prefetch = 0 : i64, scratch_operands = 0 : i64, tpu.core_type = #tpu.core_type<tc>, window_params = [{transform_indices = @transform_0, window_bounds = array<i64: 16, 32>}, {pipeline_mode = #tpu.pipeline_mode<synchronous>, transform_indices = @transform_1, window_bounds = array<i64: 32, 32>}, {pipeline_mode = #tpu.pipeline_mode<synchronous>, transform_indices = @transform_2, window_bounds = array<i64: 1, 32>}, {pipeline_mode = #tpu.pipeline_mode<synchronous>, transform_indices = @transform_3, window_bounds = array<i64: 32, 32>}, {pipeline_mode = #tpu.pipeline_mode<synchronous>, transform_indices = @transform_4, window_bounds = array<i64: 1, 32>}, {transform_indices = @transform_5, window_bounds = array<i64: 16, 32>}]} {
    %c0 = arith.constant 0 : index
    %c0_0 = arith.constant 0 : index
    %0 = vector.load %arg1[%c0, %c0_0] : memref<16x32xf32, #tpu.memory_space<vmem>>, vector<16x32xf32>
    %c0_1 = arith.constant 0 : index
    %c0_2 = arith.constant 0 : index
    %1 = vector.load %arg2[%c0_1, %c0_2] : memref<32x32xf32, #tpu.memory_space<vmem>>, vector<32x32xf32>
    %cst = arith.constant dense<0.000000e+00> : vector<16x32xf32>
    %2 = tpu.matmul %0, %1, %cst {dimension_numbers = #tpu.dot_dimension_numbers<[1], [1], [0], [0], [0, 0, 1, 0], [], []>} : vector<16x32xf32>, vector<32x32xf32>, vector<16x32xf32> -> vector<16x32xf32>
    %c0_3 = arith.constant 0 : index
    %c0_4 = arith.constant 0 : index
    %3 = vector.load %arg3[%c0_3, %c0_4] : memref<1x32xf32, #tpu.memory_space<vmem>>, vector<1x32xf32>
    %4 = vector.broadcast %3 : vector<1x32xf32> to vector<16x32xf32>
    %5 = arith.addf %2, %4 : vector<16x32xf32>
    %cst_5 = arith.constant 0.000000e+00 : f32
    %6 = vector.broadcast %cst_5 : f32 to vector<16x32xf32>
    %7 = arith.maximumf %5, %6 : vector<16x32xf32>
    %c0_6 = arith.constant 0 : index
    %c0_7 = arith.constant 0 : index
    %8 = vector.load %arg4[%c0_6, %c0_7] : memref<32x32xf32, #tpu.memory_space<vmem>>, vector<32x32xf32>
    %cst_8 = arith.constant dense<0.000000e+00> : vector<16x32xf32>
    %9 = tpu.matmul %7, %8, %cst_8 {dimension_numbers = #tpu.dot_dimension_numbers<[1], [1], [0], [0], [0, 0, 1, 0], [], []>} : vector<16x32xf32>, vector<32x32xf32>, vector<16x32xf32> -> vector<16x32xf32>
    %c0_9 = arith.constant 0 : index
    %c0_10 = arith.constant 0 : index
    %10 = vector.load %arg5[%c0_9, %c0_10] : memref<1x32xf32, #tpu.memory_space<vmem>>, vector<1x32xf32>
    %11 = vector.broadcast %10 : vector<1x32xf32> to vector<16x32xf32>
    %12 = arith.addf %9, %11 : vector<16x32xf32>
    %13 = arith.addf %12, %0 : vector<16x32xf32>
    %c0_11 = arith.constant 0 : index
    %c0_12 = arith.constant 0 : index
    %14 = vector.load %arg6[%c0_11, %c0_12] : memref<16x32xf32, #tpu.memory_space<vmem>>, vector<16x32xf32>
    tpu.vector_store %arg6[%c0_11, %c0_12], %13 {strides = array<i32>} : memref<16x32xf32, #tpu.memory_space<vmem>>, vector<16x32xf32>,
    return
  }
  func.func @transform_0(%arg0: i32) -> (i32, i32) {
    %c0_i32 = arith.constant 0 : i32
    %c0_i32_0 = arith.constant 0 : i32
    return %arg0, %c0_i32 : i32, i32
  }
  func.func @transform_1(%arg0: i32) -> (i32, i32) {
    %c0_i32 = arith.constant 0 : i32
    %c0_i32_0 = arith.constant 0 : i32
    %c0_i32_1 = arith.constant 0 : i32
    return %c0_i32, %c0_i32_0 : i32, i32
  }
  func.func @transform_2(%arg0: i32) -> (i32, i32) {
    %c0_i32 = arith.constant 0 : i32
    %c0_i32_0 = arith.constant 0 : i32
    %c0_i32_1 = arith.constant 0 : i32
    return %c0_i32, %c0_i32_0 : i32, i32
  }
  func.func @transform_3(%arg0: i32) -> (i32, i32) {
    %c0_i32 = arith.constant 0 : i32
    %c0_i32_0 = arith.constant 0 : i32
    %c0_i32_1 = arith.constant 0 : i32
    return %c0_i32, %c0_i32_0 : i32, i32
  }
  func.func @transform_4(%arg0: i32) -> (i32, i32) {
    %c0_i32 = arith.constant 0 : i32
    %c0_i32_0 = arith.constant 0 : i32
    %c0_i32_1 = arith.constant 0 : i32
    return %c0_i32, %c0_i32_0 : i32, i32
  }
  func.func @transform_5(%arg0: i32) -> (i32, i32) {
    %c0_i32 = arith.constant 0 : i32
    %c0_i32_0 = arith.constant 0 : i32
    return %arg0, %c0_i32 : i32, i32
  }
}

</mosaic_0001>

<llo_original>
// kernel: pointwise_ffn_forward.1
$region0: #{pointwise_ffn_forward.1}
  #allocation0 [shape = 'u32[]', space=smem, size = 0x4, offset = 0x4, fixed_abs, tag = 'smem constant byte address 0x4 - core index']
  #allocation1 [shape = 'u32[72,128]{1,0:T(1,128)}', space=vmem, size = 0x9000, scoped, tag = 'internal scratch']
  %s0 = inlined_call_operand.hbm [shape: f32[16,32], index: 0, kind: input, shape index: {}]
  %s1 = inlined_call_operand.hbm [shape: f32[32,32], index: 1, kind: input, shape index: {}]
  %s2 = inlined_call_operand.vmem [shape: f32[1,32], index: 2, kind: input, shape index: {}]
  %s3 = inlined_call_operand.hbm [shape: f32[32,32], index: 3, kind: input, shape index: {}]
  %s4 = inlined_call_operand.vmem [shape: f32[1,32], index: 4, kind: input, shape index: {}]
  %s5 = inlined_call_operand.hbm [shape: f32[16,32], index: 5, kind: output, shape index: {}]
  %s6 = sld [smem:[#allocation0]]
  $region42: #{pointwise_ffn_forward.1} parent=0
    _
  %s8 = ssub.s32 1, %s6
  %s9 = scalar_select 0, %s8, %s6
  $region1: #{pointwise_ffn_forward.1} parent=0
    #allocation2 [shape = 'u8[8192]{0}', space=vmem, size = 0x2000, scoped, tag = 'input window, operand 0, single buffered']
    #allocation3 [shape = 's32[1]{0}', space=sflag, size = 0x4, scoped, tag = 'scoped memory for pointwise_ffn_forward.1']
    #allocation4 [shape = 's32[1]{0}', space=sflag, size = 0x4, scoped, tag = 'scoped memory for pointwise_ffn_forward.1']
    #allocation5 [shape = 'u8[16384]{0}', space=vmem, size = 0x4000, scoped, tag = 'input window, operand 1, single buffered']
    #allocation6 [shape = 's32[1]{0}', space=sflag, size = 0x4, scoped, tag = 'scoped memory for pointwise_ffn_forward.1']
    #allocation7 [shape = 'u8[16384]{0}', space=vmem, size = 0x4000, scoped, tag = 'input window, operand 3, single buffered']
    #allocation8 [shape = 'u8[8192]{0}', space=vmem, size = 0x2000, scoped, tag = 'output window, operand 0, single buffered']
    %10 = vsyncpa [#allocation3], 0
    %11 = vsyncpa [#allocation6], 0
    %12 = vsyncpa [#allocation4], 0
    // Predicated region
    $region2: #{pointwise_ffn_forward.1} parent=1 // pred_check
      _
    $region3: #{pointwise_ffn_forward.1} parent=1 // pred_check_branch
      %14 = sbr.rel (0) target = $region5
    $region4: #{pointwise_ffn_forward.1} parent=1 // pred_region
      %16 = vsyncadd [#allocation3], 0
      %s17 = sshll.u32 %s0, 4
      %s18 = int_to_ptr.hbm [resolvable:$true] %s17
      %s19 = sshll.u32 [#allocation2], 4
      %s20 = int_to_ptr.vmem [resolvable:$true] %s19
      %25 = dma.hbm_to_vmem [thread:$0]  %s18, 256, %s20, [#allocation3], 128, 128, 8
    $region5: #{pointwise_ffn_forward.1} parent=1 // pred_fallthru
      _
    // Predicated region
    $region6: #{pointwise_ffn_forward.1} parent=1 // pred_check
      _
    $region7: #{pointwise_ffn_forward.1} parent=1 // pred_check_branch
      %27 = sbr.rel (0) target = $region9
    $region8: #{pointwise_ffn_forward.1} parent=1 // pred_region
      %29 = vsyncadd [#allocation6], 0
      %s30 = sshll.u32 %s1, 4
      %s31 = int_to_ptr.hbm [resolvable:$true] %s30
      %s32 = sshll.u32 [#allocation5], 4
      %s33 = int_to_ptr.vmem [resolvable:$true] %s32
      %38 = dma.hbm_to_vmem [thread:$0]  %s31, 512, %s33, [#allocation6], 128, 128, 8
    $region9: #{pointwise_ffn_forward.1} parent=1 // pred_fallthru
      _
    // Predicated region
    $region10: #{pointwise_ffn_forward.1} parent=1 // pred_check
      _
    $region11: #{pointwise_ffn_forward.1} parent=1 // pred_check_branch
      %40 = sbr.rel (0) target = $region13
    $region12: #{pointwise_ffn_forward.1} parent=1 // pred_region
      _
    $region13: #{pointwise_ffn_forward.1} parent=1 // pred_fallthru
      _
    // Predicated region
    $region14: #{pointwise_ffn_forward.1} parent=1 // pred_check
      _
    $region15: #{pointwise_ffn_forward.1} parent=1 // pred_check_branch
      %42 = sbr.rel (0) target = $region17
    $region16: #{pointwise_ffn_forward.1} parent=1 // pred_region
      %44 = vsyncadd [#allocation6], 0
      %s45 = sshll.u32 %s3, 4
      %s46 = int_to_ptr.hbm [resolvable:$true] %s45
      %s47 = sshll.u32 [#allocation7], 4
      %s48 = int_to_ptr.vmem [resolvable:$true] %s47
      %53 = dma.hbm_to_vmem [thread:$0]  %s46, 512, %s48, [#allocation6], 128, 128, 8
    $region17: #{pointwise_ffn_forward.1} parent=1 // pred_fallthru
      _
    // Predicated region
    $region18: #{pointwise_ffn_forward.1} parent=1 // pred_check
      _
    $region19: #{pointwise_ffn_forward.1} parent=1 // pred_check_branch
      %55 = sbr.rel (0) target = $region21
    $region20: #{pointwise_ffn_forward.1} parent=1 // pred_region
      _
    $region21: #{pointwise_ffn_forward.1} parent=1 // pred_fallthru
      _
    // Predicated region
    $region22: #{pointwise_ffn_forward.1} parent=1 // pred_check
      _
    $region23: #{pointwise_ffn_forward.1} parent=1 // pred_check_branch
      %57 = sbr.rel (0) target = $region25
    $region24: #{pointwise_ffn_forward.1} parent=1 // pred_region
      %59 = dma.done [#allocation3], 256
    $region25: #{pointwise_ffn_forward.1} parent=1 // pred_fallthru
      _
    // Predicated region
    $region26: #{pointwise_ffn_forward.1} parent=1 // pred_check
      _
    $region27: #{pointwise_ffn_forward.1} parent=1 // pred_check_branch
      %61 = sbr.rel (0) target = $region29
    $region28: #{pointwise_ffn_forward.1} parent=1 // pred_region
      %63 = dma.done [#allocation6], 512
    $region29: #{pointwise_ffn_forward.1} parent=1 // pred_fallthru
      _
    // Predicated region
    $region30: #{pointwise_ffn_forward.1} parent=1 // pred_check
      _
    $region31: #{pointwise_ffn_forward.1} parent=1 // pred_check_branch
      %65 = sbr.rel (0) target = $region33
    $region32: #{pointwise_ffn_forward.1} parent=1 // pred_region
      %67 = dma.done [#allocation6], 512
    $region33: #{pointwise_ffn_forward.1} parent=1 // pred_fallthru
      _
    %v68 = vld [vmem:[#allocation2] sm:$0xff]
    %v69 = vld [vmem:[#allocation2 + $0x8] sm:$0xff]
    %v70 = vld [vmem:[#allocation5] sm:$0xff]
    %v71 = vld [vmem:[#allocation5 + $0x8] sm:$0xff]
    %v72 = vld [vmem:[#allocation5 + $0x10] sm:$0xff]
    %v73 = vld [vmem:[#allocation5 + $0x18] sm:$0xff]
    %v74 = vld [vmem:[%s2] sm:$0x1]
    %v76 = vperm.slane %v74, 0
    %vm78 = vcmask 261120
    %v80 = vsel %vm78, %v68, 0
    %v83 = vsel %vm78, %v69, 0
    %v86 = vsel %vm78, %v70, 0
    %v89 = vsel %vm78, %v71, 0
    %v92 = vsel %vm78, %v72, 0
    %v95 = vsel %vm78, %v73, 0
    %97 = vmatpush.xpose.msra.mxu0 0.0
    %98 = vmatpush.xpose.msra.mxu0 0.0
    %99 = vmatpush.xpose.msra.mxu0 0.0
    %100 = vmatpush.xpose.msra.mxu0 0.0
    %101 = vmatpush.xpose.msra.mxu0 0.0
    %102 = vmatpush.xpose.msra.mxu0 0.0
    %103 = vmatpush.xpose.msra.mxu0 0.0
    %104 = vmatpush.xpose.msra.mxu0 0.0
    %105 = vmatpush.xpose.msra.mxu0 0.0
    %106 = vmatpush.xpose.msra.mxu0 0.0
    %107 = vmatpush.xpose.msra.mxu0 0.0
    %108 = vmatpush.xpose.msra.mxu0 0.0
    %109 = vmatpush.xpose.msra.mxu0 %v95
    %110 = vmatpush.xpose.msra.mxu0 %v92
    %111 = vmatpush.xpose.msra.mxu0 %v89
    %112 = vmatpush.xpose.msra.mxu0 %v86
    %113 = vmatmul.f32.gmra.mxu0 %v80
    %v114 = vpop.f32.mrf.mxu0
    %v115 = vadd.f32 %v76, %v114
    %116 = vmatmul.f32.gmra.mxu0 %v83
    %v117 = vpop.f32.mrf.mxu0
    %v118 = vadd.f32 %v76, %v117
    %119 = vdwg.mxu0
    %v120 = vmax.f32 %v115, 0.0
    %v121 = vmax.f32 %v118, 0.0
    %v122 = vld [vmem:[#allocation7] sm:$0xff]
    %v123 = vld [vmem:[#allocation7 + $0x8] sm:$0xff]
    %v124 = vld [vmem:[#allocation7 + $0x10] sm:$0xff]
    %v125 = vld [vmem:[#allocation7 + $0x18] sm:$0xff]
    %v126 = vld [vmem:[%s4] sm:$0x1]
    %v128 = vperm.slane %v126, 0
    %v131 = vsel %vm78, %v120, 0
    %v134 = vsel %vm78, %v121, 0
    %v137 = vsel %vm78, %v122, 0
    %v140 = vsel %vm78, %v123, 0
    %v143 = vsel %vm78, %v124, 0
    %v146 = vsel %vm78, %v125, 0
    %148 = vmatpush.xpose.msra.mxu0 0.0
    %149 = vmatpush.xpose.msra.mxu0 0.0
    %150 = vmatpush.xpose.msra.mxu0 0.0
    %151 = vmatpush.xpose.msra.mxu0 0.0
    %152 = vmatpush.xpose.msra.mxu0 0.0
    %153 = vmatpush.xpose.msra.mxu0 0.0
    %154 = vmatpush.xpose.msra.mxu0 0.0
    %155 = vmatpush.xpose.msra.mxu0 0.0
    %156 = vmatpush.xpose.msra.mxu0 0.0
    %157 = vmatpush.xpose.msra.mxu0 0.0
    %158 = vmatpush.xpose.msra.mxu0 0.0
    %159 = vmatpush.xpose.msra.mxu0 0.0
    %160 = vmatpush.xpose.msra.mxu0 %v146
    %161 = vmatpush.xpose.msra.mxu0 %v143
    %162 = vmatpush.xpose.msra.mxu0 %v140
    %163 = vmatpush.xpose.msra.mxu0 %v137
    %164 = vmatmul.f32.gmra.mxu0 %v131
    %v165 = vpop.f32.mrf.mxu0
    %v166 = vadd.f32 %v128, %v165
    %167 = vmatmul.f32.gmra.mxu0 %v134
    %v168 = vpop.f32.mrf.mxu0
    %v169 = vadd.f32 %v128, %v168
    %170 = vdwg.mxu0
    %v171 = vadd.f32 %v166, %v68
    %v172 = vadd.f32 %v169, %v69
    %173 = vst.msk [vmem:[#allocation8] sm:$0xff] %vm78, %v171
    %174 = vst.msk [vmem:[#allocation8 + $0x8] sm:$0xff] %vm78, %v172
    // Predicated region
    $region34: #{pointwise_ffn_forward.1} parent=1 // pred_check
      _
    $region35: #{pointwise_ffn_forward.1} parent=1 // pred_check_branch
      %176 = sbr.rel (0) target = $region37
    $region36: #{pointwise_ffn_forward.1} parent=1 // pred_region
      %178 = vsyncadd [#allocation4], 0
      %s179 = sshll.u32 [#allocation8], 4
      %s180 = int_to_ptr.vmem [resolvable:$true] %s179
      %s181 = sshll.u32 %s5, 4
      %s182 = int_to_ptr.hbm [resolvable:$true] %s181
      %187 = dma.vmem_to_hbm [thread:$0]  %s180, 256, %s182, [#allocation4], 128, 128, 8
    $region37: #{pointwise_ffn_forward.1} parent=1 // pred_fallthru
      _
    // Predicated region
    $region38: #{pointwise_ffn_forward.1} parent=1 // pred_check
      _
    $region39: #{pointwise_ffn_forward.1} parent=1 // pred_check_branch
      %189 = sbr.rel (0) target = $region41
    $region40: #{pointwise_ffn_forward.1} parent=1 // pred_region
      %191 = dma.done [#allocation4], 256
    $region41: #{pointwise_ffn_forward.1} parent=1 // pred_fallthru
      _
    %192 = vsyncpa [#allocation3], 1
    %193 = vsyncpa [#allocation6], 1
    %194 = vsyncpa [#allocation4], 1

</llo_original>
